<compile_context>
chip_gen: v7x
topology: tpu7x:2x2x1
jax: 0.10.0
libtpu: 0.0.40
codegen_flags: <defaults>
</compile_context>

<pallas_src>
import math

import jax
import jax.numpy as jnp
from jax.experimental import pallas as pl
from jax.experimental.pallas import tpu as pltpu

LANES = 128


def _make_kernel(n_nodes, mxu_dtype, tanh_dtype):
    def kernel(x_ref, w_ref, b_ref, o_ref):
        bsz = x_ref.shape[0]
        n_in = x_ref.shape[1]
        lanes = w_ref.shape[-1]
        nx = o_ref.shape[1]

        # Place net_in at lanes [n_nodes, n_nodes + n_in); all other lanes 0.
        # The static lane offset replaces the per-step pltpu.roll of the
        # previous revision (W1's live rows are packed at the same offset).
        x = jnp.concatenate(
            [jnp.zeros((bsz, n_nodes), jnp.float32),
             x_ref[...],
             jnp.zeros((bsz, lanes - n_nodes - n_in), jnp.float32)],
            axis=1)                                            # (B, 128) f32

        b = b_ref[...]                                         # (8, 128) f32

        def mm(a, w):                                          # MXU, f32 accumulate
            return jnp.dot(a.astype(mxu_dtype), w,
                           preferred_element_type=jnp.float32)

        # feed_forward_nn: Linear -> Tanh -> Linear -> Tanh (tanh on the EUP).
        # Padded lanes stay exactly 0 (zero weight columns + zero bias lanes).
        h1 = jnp.tanh((mm(x, w_ref[0]) + b[0:1, :]).astype(tanh_dtype))
        h2 = jnp.tanh((mm(h1, w_ref[1]) + b[1:2, :]).astype(tanh_dtype))

        # Fused final layer: rows [0, n_nodes) of w_ref[2] = W3 (MLP head),
        # rows [n_nodes, n_nodes + n_in) = Wl (linear skip). Fused input
        # z = [h2 | net_in | 0] is a plain VPU add (lanes are disjoint).
        z = h2.astype(jnp.float32) + x
        out = mm(z, w_ref[2]) + b[2:3, :]                      # bias row 2 = bl + b3

        # Output ReLU (self.m). Narrow (block_b, nx) store; no wrapper slice.
        o_ref[...] = jnp.maximum(out[:, :nx], 0.0)

    return kernel


def pack_params(params, *, lanes=LANES, mxu_dtype=jnp.bfloat16):
    """Pack the 8 per-layer tensors into one weight slab + one bias slab."""
    wl, bl, w1, b1, w2, b2, w3, b3 = params
    n_in, n_nodes = w1.shape
    nx = wl.shape[1]
    assert n_nodes <= lanes and nx <= lanes
    assert n_in + n_nodes <= lanes, "fused final matmul needs n_in + n_nodes <= 128"

    w_slab = jnp.zeros((3, lanes, lanes), jnp.float32)
    # Layer 1: rows shifted to [n_nodes, n_nodes+n_in) so net_in needs no roll.
    w_slab = w_slab.at[0, n_nodes:n_nodes + n_in, :n_nodes].set(w1)
    w_slab = w_slab.at[1, :n_nodes, :n_nodes].set(w2)              # hidden layer
    w_slab = w_slab.at[2, :n_nodes, :nx].set(w3)                   # MLP output layer
    w_slab = w_slab.at[2, n_nodes:n_nodes + n_in, :nx].set(wl)     # linear skip path

    b_slab = jnp.zeros((8, lanes), jnp.float32)
    b_slab = b_slab.at[0, :n_nodes].set(b1.reshape(-1))
    b_slab = b_slab.at[1, :n_nodes].set(b2.reshape(-1))
    b_slab = b_slab.at[2, :nx].set((bl + b3).reshape(-1))

    meta = dict(n_in=n_in, n_nodes=n_nodes, nx=nx)
    return w_slab.astype(mxu_dtype), b_slab, meta


def positive_default_encoder_forward(upast, ypast, packed, *, block_b=None,
                                     tanh_dtype=jnp.float32):
    """upast: (B, nb, *nu), ypast: (B, na, *ny) -> (B, nx), float32."""
    w_slab, b_slab, meta = packed
    n_in, n_nodes, nx = meta["n_in"], meta["n_nodes"], meta["nx"]
    lanes = w_slab.shape[-1]
    assert n_in + n_nodes <= lanes and nx <= lanes and n_nodes <= lanes

    B = upast.shape[0]
    # flatten + concat once in the wrapper -> one narrow (B, n_in) operand.
    net_in = jnp.concatenate(
        [upast.reshape(B, -1).astype(jnp.float32),
         ypast.reshape(B, -1).astype(jnp.float32)], axis=1)
    assert net_in.shape[1] == n_in

    if block_b is None:
        # Large tiles amortize the ~0.35 us per-grid-step overhead; keep >= 2
        # blocks once B is big so the pipeline / v7x megacore has work to split.
        block_b = 512 if B > 512 else ((B + 7) // 8) * 8
    assert block_b % 8 == 0
    n_blocks = -(-B // block_b)
    Bp = n_blocks * block_b
    if Bp != B:                                     # pad batch to a block multiple
        net_in = jnp.pad(net_in, ((0, Bp - B), (0, 0)))

    w_itemsize = jnp.dtype(w_slab.dtype).itemsize
    cost = pl.CostEstimate(
        flops=2 * 3 * Bp * lanes * lanes,
        transcendentals=2 * Bp * lanes,
        bytes_accessed=(Bp * (n_in + nx) * 4
                        + 3 * lanes * lanes * w_itemsize
                        + 8 * lanes * 4),
    )

    out = pl.pallas_call(
        _make_kernel(n_nodes=n_nodes, mxu_dtype=w_slab.dtype, tanh_dtype=tanh_dtype),
        out_shape=jax.ShapeDtypeStruct((Bp, nx), jnp.float32),
        grid=(n_blocks,),
        in_specs=[
            pl.BlockSpec((block_b, n_in), lambda i: (i, 0)),
            # constant index_map -> weight/bias slabs stay resident in VMEM
            pl.BlockSpec((3, lanes, lanes), lambda i: (0, 0, 0)),
            pl.BlockSpec((8, lanes), lambda i: (0, 0)),
        ],
        out_specs=pl.BlockSpec((block_b, nx), lambda i: (i, 0)),
        compiler_params=pltpu.CompilerParams(
            dimension_semantics=("parallel",),       # batch blocks across TCs (v7x)
            vmem_limit_bytes=32 * 1024 * 1024),
        cost_estimate=cost,
    )(net_in, w_slab, b_slab)

    return out[:B]


def init_params(key, n_in, n_nodes, nx):
    """torch.nn.Linear-style init U(-1/sqrt(fan_in), 1/sqrt(fan_in)); weights are (in, out)."""
    def linear(key, fan_in, fan_out):
        kw, kb = jax.random.split(key)
        bound = 1.0 / math.sqrt(fan_in)
        w = jax.random.uniform(kw, (fan_in, fan_out), jnp.float32, -bound, bound)
        b = jax.random.uniform(kb, (1, fan_out), jnp.float32, -bound, bound)
        return w, b

    k_lin, k1, k2, k3 = jax.random.split(key, 4)
    wl, bl = linear(k_lin, n_in, nx)        # simple_res_net.net_lin
    w1, b1 = linear(k1, n_in, n_nodes)      # feed_forward_nn layer 1
    w2, b2 = linear(k2, n_nodes, n_nodes)   # feed_forward_nn layer 2 (hidden)
    w3, b3 = linear(k3, n_nodes, nx)        # feed_forward_nn output layer
    return (wl, bl, w1, b1, w2, b2, w3, b3)


def reference_forward(upast, ypast, params):
    """Pure-JAX reference for correctness check."""
    B = upast.shape[0]
    x = jnp.concatenate([upast.reshape(B, -1), ypast.reshape(B, -1)], axis=1)
    wl, bl, w1, b1, w2, b2, w3, b3 = params
    lin = x @ wl + bl
    h = jnp.tanh(x @ w1 + b1)
    h = jnp.tanh(h @ w2 + b2)
    nonlin = h @ w3 + b3
    return jnp.maximum(lin + nonlin, 0.0)


if __name__ == "__main__":
    # Module hyper-parameters (small, consistent with the torch module):
    nb, nu = 8, 2        # upast: (B, nb, nu)
    na, ny = 8, 1        # ypast: (B, na, ny)
    nx = 4
    n_nodes_per_layer = 64
    n_in = nb * nu + na * ny     # 24

    key = jax.random.PRNGKey(0)
    k_u, k_y, k_p = jax.random.split(key, 3)
    params = init_params(k_p, n_in, n_nodes_per_layer, nx)

    # --- f32-MXU path, B = 8 (single grid point), tight tolerance ---
    batch = 8
    upast = jax.random.normal(k_u, (batch, nb, nu), jnp.float32)
    ypast = jax.random.normal(k_y, (batch, na, ny), jnp.float32)
    ref = reference_forward(upast, ypast, params)

    packed_f32 = pack_params(params, mxu_dtype=jnp.float32)
    out = jax.block_until_ready(
        positive_default_encoder_forward(upast, ypast, packed_f32))
    assert out.shape == (batch, nx)
    assert jnp.allclose(out, ref, atol=1e-4, rtol=1e-4), "f32 kernel mismatch"

    # --- default bf16 MXU operands (f32 accumulate, f32 tanh: v5e-safe) ---
    packed_bf16 = pack_params(params)                     # bf16 is now the default
    out_bf16 = jax.block_until_ready(
        positive_default_encoder_forward(upast, ypast, packed_bf16))
    assert jnp.allclose(out_bf16, ref, atol=5e-2, rtol=5e-2), "bf16 kernel mismatch"

    # --- bf16 tanh (v6e/v7x EUP path), looser tolerance ---
    out_bf16_eup = jax.block_until_ready(
        positive_default_encoder_forward(upast, ypast, packed_bf16,
                                         tanh_dtype=jnp.bfloat16))
    assert jnp.allclose(out_bf16_eup, ref, atol=1e-1, rtol=1e-1), "bf16-tanh mismatch"

    # --- multi-block batch grid (parallel semantics path), f32, tight ---
    batch2 = 32
    upast2 = jax.random.normal(k_u, (batch2, nb, nu), jnp.float32)
    ypast2 = jax.random.normal(k_y, (batch2, na, ny), jnp.float32)
    ref2 = reference_forward(upast2, ypast2, params)
    out2 = jax.block_until_ready(
        positive_default_encoder_forward(upast2, ypast2, packed_f32, block_b=8))
    assert jnp.allclose(out2, ref2, atol=1e-4, rtol=1e-4), "gridded kernel mismatch"

    print("KERNEL_OK")
</pallas_src>

<mosaic_0001>
module attributes {stable_mosaic.version = 11 : i64} {
  func.func @kernel(%arg0: i32, %arg1: memref<8x24xf32, #tpu.memory_space<vmem>>, %arg2: memref<3x128x128xf32, #tpu.memory_space<vmem>>, %arg3: memref<8x128xf32, #tpu.memory_space<vmem>>, %arg4: memref<8x4xf32, #tpu.memory_space<vmem>>) attributes {dimension_semantics = [#tpu.dimension_semantics<parallel>], iteration_bounds = array<i64: 1>, scalar_prefetch = 0 : i64, scratch_operands = 0 : i64, tpu.core_type = #tpu.core_type<tc>, window_params = [{transform_indices = @transform_0, window_bounds = array<i64: 8, 24>}, {pipeline_mode = #tpu.pipeline_mode<synchronous>, transform_indices = @transform_1, window_bounds = array<i64: 3, 128, 128>}, {pipeline_mode = #tpu.pipeline_mode<synchronous>, transform_indices = @transform_2, window_bounds = array<i64: 8, 128>}, {transform_indices = @transform_3, window_bounds = array<i64: 8, 4>}]} {
    %cst = arith.constant 0.000000e+00 : f32
    %0 = vector.broadcast %cst : f32 to vector<8x64xf32>
    %c0 = arith.constant 0 : index
    %c0_0 = arith.constant 0 : index
    %1 = vector.load %arg1[%c0, %c0_0] : memref<8x24xf32, #tpu.memory_space<vmem>>, vector<8x24xf32>
    %cst_1 = arith.constant 0.000000e+00 : f32
    %2 = vector.broadcast %cst_1 : f32 to vector<8x40xf32>
    %3 = tpu.concatenate %0, %1, %2 in 1 : vector<8x64xf32>, vector<8x24xf32>, vector<8x40xf32> -> vector<8x128xf32>
    %c0_2 = arith.constant 0 : index
    %c0_3 = arith.constant 0 : index
    %4 = vector.load %arg3[%c0_2, %c0_3] : memref<8x128xf32, #tpu.memory_space<vmem>>, vector<8x128xf32>
    %c0_4 = arith.constant 0 : index
    %c0_5 = arith.constant 0 : index
    %c0_6 = arith.constant 0 : index
    %5 = vector.load %arg2[%c0_4, %c0_5, %c0_6] : memref<3x128x128xf32, #tpu.memory_space<vmem>>, vector<1x128x128xf32>
    %6 = vector.shape_cast %5 : vector<1x128x128xf32> to vector<128x128xf32>
    %cst_7 = arith.constant dense<0.000000e+00> : vector<8x128xf32>
    %7 = tpu.matmul %3, %6, %cst_7 {dimension_numbers = #tpu.dot_dimension_numbers<[1], [0], [0], [1], [0, 0, 1, 1], [], []>} : vector<8x128xf32>, vector<128x128xf32>, vector<8x128xf32> -> vector<8x128xf32>
    %8 = vector.extract_strided_slice %4 {offsets = [0, 0], sizes = [1, 128], strides = [1, 1]} : vector<8x128xf32> to vector<1x128xf32>
    %9 = vector.broadcast %8 : vector<1x128xf32> to vector<8x128xf32>
    %10 = arith.addf %7, %9 : vector<8x128xf32>
    %11 = math.tanh %10 : vector<8x128xf32>
    %c1 = arith.constant 1 : index
    %c0_8 = arith.constant 0 : index
    %c0_9 = arith.constant 0 : index
    %12 = vector.load %arg2[%c1, %c0_8, %c0_9] : memref<3x128x128xf32, #tpu.memory_space<vmem>>, vector<1x128x128xf32>
    %13 = vector.shape_cast %12 : vector<1x128x128xf32> to vector<128x128xf32>
    %cst_10 = arith.constant dense<0.000000e+00> : vector<8x128xf32>
    %14 = tpu.matmul %11, %13, %cst_10 {dimension_numbers = #tpu.dot_dimension_numbers<[1], [0], [0], [1], [0, 0, 1, 1], [], []>} : vector<8x128xf32>, vector<128x128xf32>, vector<8x128xf32> -> vector<8x128xf32>
    %15 = vector.extract_strided_slice %4 {offsets = [1, 0], sizes = [1, 128], strides = [1, 1]} : vector<8x128xf32> to vector<1x128xf32>
    %16 = vector.broadcast %15 : vector<1x128xf32> to vector<8x128xf32>
    %17 = arith.addf %14, %16 : vector<8x128xf32>
    %18 = math.tanh %17 : vector<8x128xf32>
    %19 = arith.addf %18, %3 : vector<8x128xf32>
    %c2 = arith.constant 2 : index
    %c0_11 = arith.constant 0 : index
    %c0_12 = arith.constant 0 : index
    %20 = vector.load %arg2[%c2, %c0_11, %c0_12] : memref<3x128x128xf32, #tpu.memory_space<vmem>>, vector<1x128x128xf32>
    %21 = vector.shape_cast %20 : vector<1x128x128xf32> to vector<128x128xf32>
    %cst_13 = arith.constant dense<0.000000e+00> : vector<8x128xf32>
    %22 = tpu.matmul %19, %21, %cst_13 {dimension_numbers = #tpu.dot_dimension_numbers<[1], [0], [0], [1], [0, 0, 1, 1], [], []>} : vector<8x128xf32>, vector<128x128xf32>, vector<8x128xf32> -> vector<8x128xf32>
    %23 = vector.extract_strided_slice %4 {offsets = [2, 0], sizes = [1, 128], strides = [1, 1]} : vector<8x128xf32> to vector<1x128xf32>
    %24 = vector.broadcast %23 : vector<1x128xf32> to vector<8x128xf32>
    %25 = arith.addf %22, %24 : vector<8x128xf32>
    %26 = vector.extract_strided_slice %25 {offsets = [0, 0], sizes = [8, 4], strides = [1, 1]} : vector<8x128xf32> to vector<8x4xf32>
    %cst_14 = arith.constant 0.000000e+00 : f32
    %27 = vector.broadcast %cst_14 : f32 to vector<8x4xf32>
    %28 = arith.maximumf %26, %27 : vector<8x4xf32>
    %c0_15 = arith.constant 0 : index
    %c0_16 = arith.constant 0 : index
    %29 = vector.load %arg4[%c0_15, %c0_16] : memref<8x4xf32, #tpu.memory_space<vmem>>, vector<8x4xf32>
    tpu.vector_store %arg4[%c0_15, %c0_16], %28 {strides = array<i32>} : memref<8x4xf32, #tpu.memory_space<vmem>>, vector<8x4xf32>,
    return
  }
  func.func @transform_0(%arg0: i32) -> (i32, i32) {
    %c0_i32 = arith.constant 0 : i32
    %c0_i32_0 = arith.constant 0 : i32
    return %arg0, %c0_i32 : i32, i32
  }
  func.func @transform_1(%arg0: i32) -> (i32, i32, i32) {
    %c0_i32 = arith.constant 0 : i32
    %c0_i32_0 = arith.constant 0 : i32
    %c0_i32_1 = arith.constant 0 : i32
    %c0_i32_2 = arith.constant 0 : i32
    return %c0_i32, %c0_i32_0, %c0_i32_1 : i32, i32, i32
  }
  func.func @transform_2(%arg0: i32) -> (i32, i32) {
    %c0_i32 = arith.constant 0 : i32
    %c0_i32_0 = arith.constant 0 : i32
    %c0_i32_1 = arith.constant 0 : i32
    return %c0_i32, %c0_i32_0 : i32, i32
  }
  func.func @transform_3(%arg0: i32) -> (i32, i32) {
    %c0_i32 = arith.constant 0 : i32
    %c0_i32_0 = arith.constant 0 : i32
    return %arg0, %c0_i32 : i32, i32
  }
}

</mosaic_0001>

<llo_original>
// kernel: tpu_custom_call.1
$region0: #{tpu_custom_call.1}
  #allocation0 [shape = 'u32[]', space=smem, size = 0x4, offset = 0x4, fixed_abs, tag = 'smem constant byte address 0x4 - core index']
  #allocation1 [shape = 'u32[144,128]{1,0:T(1,128)}', space=vmem, size = 0x12000, scoped, tag = 'internal scratch']
  %s0 = inlined_call_operand.hbm [shape: f32[8,24], index: 0, kind: input, shape index: {}]
  %s1 = inlined_call_operand.hbm [shape: f32[3,128,128], index: 1, kind: input, shape index: {}]
  %s2 = inlined_call_operand.hbm [shape: f32[8,128], index: 2, kind: input, shape index: {}]
  %s3 = inlined_call_operand.vmem [shape: f32[8,4], index: 3, kind: output, shape index: {}]
  %s4 = sld [smem:[#allocation0]]
  $region34: #{tpu_custom_call.1} parent=0
    _
  %s6 = ssub.s32 1, %s4
  %s7 = scalar_select 0, %s6, %s4
  $region1: #{tpu_custom_call.1} parent=0
    #allocation2 [shape = 'u8[4096]{0}', space=vmem, size = 0x1000, scoped, tag = 'input window, operand 0, single buffered']
    #allocation3 [shape = 's32[1]{0}', space=sflag, size = 0x4, scoped, tag = 'scoped memory for tpu_custom_call.1']
    #allocation4 [shape = 'u8[196608]{0}', space=vmem, size = 0x30000, scoped, tag = 'input window, operand 1, single buffered']
    #allocation5 [shape = 's32[1]{0}', space=sflag, size = 0x4, scoped, tag = 'scoped memory for tpu_custom_call.1']
    #allocation6 [shape = 'u8[4096]{0}', space=vmem, size = 0x1000, scoped, tag = 'input window, operand 2, single buffered']
    %8 = vsyncpa [#allocation3], 0
    %9 = vsyncpa [#allocation5], 0
    // Predicated region
    $region2: #{tpu_custom_call.1} parent=1 // pred_check
      _
    $region3: #{tpu_custom_call.1} parent=1 // pred_check_branch
      %11 = sbr.rel (0) target = $region5
    $region4: #{tpu_custom_call.1} parent=1 // pred_region
      %s13 = ssub.s32 128, 128
      %14 = vsyncadd [#allocation3], %s13
      %s16 = sshll.u32 [#allocation2], 4
      %s17 = int_to_ptr.vmem [resolvable:$true] %s16
      %19 = dma.hbm_to_vmem [thread:$0]  %s0, 128, %s17, [#allocation3]
    $region5: #{tpu_custom_call.1} parent=1 // pred_fallthru
      _
    // Predicated region
    $region6: #{tpu_custom_call.1} parent=1 // pred_check
      _
    $region7: #{tpu_custom_call.1} parent=1 // pred_check_branch
      %21 = sbr.rel (0) target = $region9
    $region8: #{tpu_custom_call.1} parent=1 // pred_region
      %s23 = ssub.s32 6144, 6144
      %24 = vsyncadd [#allocation5], %s23
      %s25 = sshll.u32 [#allocation4], 4
      %s26 = int_to_ptr.vmem [resolvable:$true] %s25
      %31 = dma.hbm_to_vmem [thread:$0]  %s1, 6144, %s26, [#allocation5], 128, 128, 8
    $region9: #{tpu_custom_call.1} parent=1 // pred_fallthru
      _
    // Predicated region
    $region10: #{tpu_custom_call.1} parent=1 // pred_check
      _
    $region11: #{tpu_custom_call.1} parent=1 // pred_check_branch
      %33 = sbr.rel (0) target = $region13
    $region12: #{tpu_custom_call.1} parent=1 // pred_region
      %s35 = ssub.s32 128, 128
      %36 = vsyncadd [#allocation5], %s35
      %s38 = sshll.u32 [#allocation6], 4
      %s39 = int_to_ptr.vmem [resolvable:$true] %s38
      %41 = dma.hbm_to_vmem [thread:$0]  %s2, 128, %s39, [#allocation5]
    $region13: #{tpu_custom_call.1} parent=1 // pred_fallthru
      _
    // Predicated region
    $region14: #{tpu_custom_call.1} parent=1 // pred_check
      _
    $region15: #{tpu_custom_call.1} parent=1 // pred_check_branch
      %43 = sbr.rel (0) target = $region17
    $region16: #{tpu_custom_call.1} parent=1 // pred_region
      %44 = dma.done [#allocation3], 128
    $region17: #{tpu_custom_call.1} parent=1 // pred_fallthru
      _
    // Predicated region
    $region18: #{tpu_custom_call.1} parent=1 // pred_check
      _
    $region19: #{tpu_custom_call.1} parent=1 // pred_check_branch
      %46 = sbr.rel (0) target = $region21
    $region20: #{tpu_custom_call.1} parent=1 // pred_region
      %47 = dma.done [#allocation5], 6144
    $region21: #{tpu_custom_call.1} parent=1 // pred_fallthru
      _
    // Predicated region
    $region22: #{tpu_custom_call.1} parent=1 // pred_check
      _
    $region23: #{tpu_custom_call.1} parent=1 // pred_check_branch
      %49 = sbr.rel (0) target = $region25
    $region24: #{tpu_custom_call.1} parent=1 // pred_region
      %50 = dma.done [#allocation5], 128
    $region25: #{tpu_custom_call.1} parent=1 // pred_fallthru
      _
    %v51 = vld [vmem:[#allocation2] sm:$0xff]
    %53 = vrot.lane.b32.xlu0 %v51, 64
    %v54 = vpop.permute.xlu0 %53
    %vm56 = vcmask 523264
    %v57 = vsel %vm56, 0.0, %v54
    %vm58 = vcmask 719872
    %v59 = vsel %vm58, %v57, 0.0
    %v60 = vld [vmem:[#allocation6] sm:$0xff]
    %v61 = vld [vmem:[#allocation4] sm:$0xff]
    %v62 = vld [vmem:[#allocation4 + $0x8] sm:$0xff]
    %v63 = vld [vmem:[#allocation4 + $0x10] sm:$0xff]
    %v64 = vld [vmem:[#allocation4 + $0x18] sm:$0xff]
    %v65 = vld [vmem:[#allocation4 + $0x20] sm:$0xff]
    %v66 = vld [vmem:[#allocation4 + $0x28] sm:$0xff]
    %v67 = vld [vmem:[#allocation4 + $0x30] sm:$0xff]
    %v68 = vld [vmem:[#allocation4 + $0x38] sm:$0xff]
    %v69 = vld [vmem:[#allocation4 + $0x40] sm:$0xff]
    %v70 = vld [vmem:[#allocation4 + $0x48] sm:$0xff]
    %v71 = vld [vmem:[#allocation4 + $0x50] sm:$0xff]
    %v72 = vld [vmem:[#allocation4 + $0x58] sm:$0xff]
    %v73 = vld [vmem:[#allocation4 + $0x60] sm:$0xff]
    %v74 = vld [vmem:[#allocation4 + $0x68] sm:$0xff]
    %v75 = vld [vmem:[#allocation4 + $0x70] sm:$0xff]
    %v76 = vld [vmem:[#allocation4 + $0x78] sm:$0xff]
    %v77 = vlaneseq
    %v78 = vshrl.u32 %v77, 7
    %v79 = vsub.s32 0, %v78
    %v80 = vrot.slane %v60, %v79
    %81 = vmatprep.subr.mxu0 0.0
    %82 = vmatpush1.msra.mxu0 %v61
    %83 = vmatprep.subr.mxu0 0.0
    %84 = vmatpush1.msra.mxu0 %v62
    %85 = vmatprep.subr.mxu0 0.0
    %86 = vmatpush1.msra.mxu0 %v63
    %87 = vmatprep.subr.mxu0 0.0
    %88 = vmatpush1.msra.mxu0 %v64
    %89 = vmatprep.subr.mxu0 0.0
    %90 = vmatpush1.msra.mxu0 %v65
    %91 = vmatprep.subr.mxu0 0.0
    %92 = vmatpush1.msra.mxu0 %v66
    %93 = vmatprep.subr.mxu0 0.0
    %94 = vmatpush1.msra.mxu0 %v67
    %95 = vmatprep.subr.mxu0 0.0
    %96 = vmatpush1.msra.mxu0 %v68
    %97 = vmatprep.subr.mxu0 0.0
    %98 = vmatpush1.msra.mxu0 %v69
    %99 = vmatprep.subr.mxu0 0.0
    %100 = vmatpush1.msra.mxu0 %v70
    %101 = vmatprep.subr.mxu0 0.0
    %102 = vmatpush1.msra.mxu0 %v71
    %103 = vmatprep.subr.mxu0 0.0
    %104 = vmatpush1.msra.mxu0 %v72
    %105 = vmatprep.subr.mxu0 0.0
    %106 = vmatpush1.msra.mxu0 %v73
    %107 = vmatprep.subr.mxu0 0.0
    %108 = vmatpush1.msra.mxu0 %v74
    %109 = vmatprep.subr.mxu0 0.0
    %110 = vmatpush1.msra.mxu0 %v75
    %111 = vmatprep.subr.mxu0 0.0
    %112 = vmatpush1.msra.mxu0 %v76
    %113 = vmatprep.subr.mxu0 0.0
    %114 = vmatpush1.msra.mxu0 0.0
    %115 = vmatprep.subr.mxu0 0.0
    %116 = vmatpush1.msra.mxu0 0.0
    %117 = vmatprep.subr.mxu0 0.0
    %118 = vmatpush1.msra.mxu0 0.0
    %119 = vmatprep.subr.mxu0 0.0
    %120 = vmatpush1.msra.mxu0 0.0
    %121 = vmatprep.subr.mxu0 0.0
    %122 = vmatpush1.msra.mxu0 0.0
    %123 = vmatprep.subr.mxu0 0.0
    %124 = vmatpush1.msra.mxu0 0.0
    %125 = vmatprep.subr.mxu0 0.0
    %126 = vmatpush1.msra.mxu0 0.0
    %127 = vmatprep.subr.mxu0 0.0
    %128 = vmatpush1.msra.mxu0 0.0
    %129 = vmatprep.subr.mxu0 0.0
    %130 = vmatpush1.msra.mxu0 0.0
    %131 = vmatprep.subr.mxu0 0.0
    %132 = vmatpush1.msra.mxu0 0.0
    %133 = vmatprep.subr.mxu0 0.0
    %134 = vmatpush1.msra.mxu0 0.0
    %135 = vmatprep.subr.mxu0 0.0
    %136 = vmatpush1.msra.mxu0 0.0
    %137 = vmatprep.subr.mxu0 0.0
    %138 = vmatpush1.msra.mxu0 0.0
    %139 = vmatprep.subr.mxu0 0.0
    %140 = vmatpush1.msra.mxu0 0.0
    %141 = vmatprep.subr.mxu0 0.0
    %142 = vmatpush1.msra.mxu0 0.0
    %143 = vmatprep.subr.mxu0 0.0
    %144 = vmatpush1.msra.mxu0 0.0
    %145 = vmatprep.mubr.f32.mxu0 0.0
    %146 = vmatmul.mubr.f32.gmra.mrb[0].mxu0 %v59
    %v147 = vpop.f32.mrb[0].mxu0
    %v148 = vadd.f32 %v80, %v147
    %v149 = vpop.f32.mrb[0].mxu0
    %150 = vdwg.mxu0
    %v151 = vtanh.pop %v148
    %s152 = scalar_lea.vmem [#allocation4], 128
    %v153 = vld [vmem:[%s152] sm:$0xff]
    %v154 = vld [vmem:[%s152 + $0x8] sm:$0xff]
    %v155 = vld [vmem:[%s152 + $0x10] sm:$0xff]
    %v156 = vld [vmem:[%s152 + $0x18] sm:$0xff]
    %v157 = vld [vmem:[%s152 + $0x20] sm:$0xff]
    %v158 = vld [vmem:[%s152 + $0x28] sm:$0xff]
    %v159 = vld [vmem:[%s152 + $0x30] sm:$0xff]
    %v160 = vld [vmem:[%s152 + $0x38] sm:$0xff]
    %v161 = vld [vmem:[%s152 + $0x40] sm:$0xff]
    %v162 = vld [vmem:[%s152 + $0x48] sm:$0xff]
    %v163 = vld [vmem:[%s152 + $0x50] sm:$0xff]
    %v164 = vld [vmem:[%s152 + $0x58] sm:$0xff]
    %v165 = vld [vmem:[%s152 + $0x60] sm:$0xff]
    %v166 = vld [vmem:[%s152 + $0x68] sm:$0xff]
    %v167 = vld [vmem:[%s152 + $0x70] sm:$0xff]
    %v168 = vld [vmem:[%s152 + $0x78] sm:$0xff]
    %v169 = vlaneseq
    %v170 = vshrl.u32 %v169, 7
    %v171 = vsub.s32 1, %v170
    %v172 = vrot.slane %v60, %v171
    %173 = vmatprep.subr.mxu0 0.0
    %174 = vmatpush1.msra.mxu0 %v153
    %175 = vmatprep.subr.mxu0 0.0
    %176 = vmatpush1.msra.mxu0 %v154
    %177 = vmatprep.subr.mxu0 0.0
    %178 = vmatpush1.msra.mxu0 %v155
    %179 = vmatprep.subr.mxu0 0.0
    %180 = vmatpush1.msra.mxu0 %v156
    %181 = vmatprep.subr.mxu0 0.0
    %182 = vmatpush1.msra.mxu0 %v157
    %183 = vmatprep.subr.mxu0 0.0
    %184 = vmatpush1.msra.mxu0 %v158
    %185 = vmatprep.subr.mxu0 0.0
    %186 = vmatpush1.msra.mxu0 %v159
    %187 = vmatprep.subr.mxu0 0.0
    %188 = vmatpush1.msra.mxu0 %v160
    %189 = vmatprep.subr.mxu0 0.0
    %190 = vmatpush1.msra.mxu0 %v161
    %191 = vmatprep.subr.mxu0 0.0
    %192 = vmatpush1.msra.mxu0 %v162
    %193 = vmatprep.subr.mxu0 0.0
    %194 = vmatpush1.msra.mxu0 %v163
    %195 = vmatprep.subr.mxu0 0.0
    %196 = vmatpush1.msra.mxu0 %v164
    %197 = vmatprep.subr.mxu0 0.0
    %198 = vmatpush1.msra.mxu0 %v165
    %199 = vmatprep.subr.mxu0 0.0
    %200 = vmatpush1.msra.mxu0 %v166
    %201 = vmatprep.subr.mxu0 0.0
    %202 = vmatpush1.msra.mxu0 %v167
    %203 = vmatprep.subr.mxu0 0.0
    %204 = vmatpush1.msra.mxu0 %v168
    %205 = vmatprep.subr.mxu0 0.0
    %206 = vmatpush1.msra.mxu0 0.0
    %207 = vmatprep.subr.mxu0 0.0
    %208 = vmatpush1.msra.mxu0 0.0
    %209 = vmatprep.subr.mxu0 0.0
    %210 = vmatpush1.msra.mxu0 0.0
    %211 = vmatprep.subr.mxu0 0.0
    %212 = vmatpush1.msra.mxu0 0.0
    %213 = vmatprep.subr.mxu0 0.0
    %214 = vmatpush1.msra.mxu0 0.0
    %215 = vmatprep.subr.mxu0 0.0
    %216 = vmatpush1.msra.mxu0 0.0
    %217 = vmatprep.subr.mxu0 0.0
    %218 = vmatpush1.msra.mxu0 0.0
    %219 = vmatprep.subr.mxu0 0.0
    %220 = vmatpush1.msra.mxu0 0.0
    %221 = vmatprep.subr.mxu0 0.0
    %222 = vmatpush1.msra.mxu0 0.0
    %223 = vmatprep.subr.mxu0 0.0
    %224 = vmatpush1.msra.mxu0 0.0
    %225 = vmatprep.subr.mxu0 0.0
    %226 = vmatpush1.msra.mxu0 0.0
    %227 = vmatprep.subr.mxu0 0.0
    %228 = vmatpush1.msra.mxu0 0.0
    %229 = vmatprep.subr.mxu0 0.0
    %230 = vmatpush1.msra.mxu0 0.0
    %231 = vmatprep.subr.mxu0 0.0
    %232 = vmatpush1.msra.mxu0 0.0
    %233 = vmatprep.subr.mxu0 0.0
    %234 = vmatpush1.msra.mxu0 0.0
    %235 = vmatprep.subr.mxu0 0.0
    %236 = vmatpush1.msra.mxu0 0.0
    %237 = vmatprep.mubr.f32.mxu0 0.0
    %238 = vmatmul.mubr.f32.gmra.mrb[0].mxu0 %v151
    %v239 = vpop.f32.mrb[0].mxu0
    %v240 = vadd.f32 %v172, %v239
    %v241 = vpop.f32.mrb[0].mxu0
    %242 = vdwg.mxu0
    %v243 = vtanh.pop %v240
    %v244 = vadd.f32 %v243, %v59
    %s245 = scalar_lea.vmem [#allocation4], 256
    %v246 = vld [vmem:[%s245] sm:$0xff]
    %v247 = vld [vmem:[%s245 + $0x8] sm:$0xff]
    %v248 = vld [vmem:[%s245 + $0x10] sm:$0xff]
    %v249 = vld [vmem:[%s245 + $0x18] sm:$0xff]
    %v250 = vld [vmem:[%s245 + $0x20] sm:$0xff]
    %v251 = vld [vmem:[%s245 + $0x28] sm:$0xff]
    %v252 = vld [vmem:[%s245 + $0x30] sm:$0xff]
    %v253 = vld [vmem:[%s245 + $0x38] sm:$0xff]
    %v254 = vld [vmem:[%s245 + $0x40] sm:$0xff]
    %v255 = vld [vmem:[%s245 + $0x48] sm:$0xff]
    %v256 = vld [vmem:[%s245 + $0x50] sm:$0xff]
    %v257 = vld [vmem:[%s245 + $0x58] sm:$0xff]
    %v258 = vld [vmem:[%s245 + $0x60] sm:$0xff]
    %v259 = vld [vmem:[%s245 + $0x68] sm:$0xff]
    %v260 = vld [vmem:[%s245 + $0x70] sm:$0xff]
    %v261 = vld [vmem:[%s245 + $0x78] sm:$0xff]
    %v262 = vlaneseq
    %v263 = vshrl.u32 %v262, 7
    %v264 = vsub.s32 2, %v263
    %v265 = vrot.slane %v60, %v264
    %266 = vmatprep.subr.mxu0 0.0
    %267 = vmatpush1.msra.mxu0 %v246
    %268 = vmatprep.subr.mxu0 0.0
    %269 = vmatpush1.msra.mxu0 %v247
    %270 = vmatprep.subr.mxu0 0.0
    %271 = vmatpush1.msra.mxu0 %v248
    %272 = vmatprep.subr.mxu0 0.0
    %273 = vmatpush1.msra.mxu0 %v249
    %274 = vmatprep.subr.mxu0 0.0
    %275 = vmatpush1.msra.mxu0 %v250
    %276 = vmatprep.subr.mxu0 0.0
    %277 = vmatpush1.msra.mxu0 %v251
    %278 = vmatprep.subr.mxu0 0.0
    %279 = vmatpush1.msra.mxu0 %v252
    %280 = vmatprep.subr.mxu0 0.0
    %281 = vmatpush1.msra.mxu0 %v253
    %282 = vmatprep.subr.mxu0 0.0
    %283 = vmatpush1.msra.mxu0 %v254
    %284 = vmatprep.subr.mxu0 0.0
    %285 = vmatpush1.msra.mxu0 %v255
    %286 = vmatprep.subr.mxu0 0.0
    %287 = vmatpush1.msra.mxu0 %v256
    %288 = vmatprep.subr.mxu0 0.0
    %289 = vmatpush1.msra.mxu0 %v257
    %290 = vmatprep.subr.mxu0 0.0
    %291 = vmatpush1.msra.mxu0 %v258
    %292 = vmatprep.subr.mxu0 0.0
    %293 = vmatpush1.msra.mxu0 %v259
    %294 = vmatprep.subr.mxu0 0.0
    %295 = vmatpush1.msra.mxu0 %v260
    %296 = vmatprep.subr.mxu0 0.0
    %297 = vmatpush1.msra.mxu0 %v261
    %298 = vmatprep.subr.mxu0 0.0
    %299 = vmatpush1.msra.mxu0 0.0
    %300 = vmatprep.subr.mxu0 0.0
    %301 = vmatpush1.msra.mxu0 0.0
    %302 = vmatprep.subr.mxu0 0.0
    %303 = vmatpush1.msra.mxu0 0.0
    %304 = vmatprep.subr.mxu0 0.0
    %305 = vmatpush1.msra.mxu0 0.0
    %306 = vmatprep.subr.mxu0 0.0
    %307 = vmatpush1.msra.mxu0 0.0
    %308 = vmatprep.subr.mxu0 0.0
    %309 = vmatpush1.msra.mxu0 0.0
    %310 = vmatprep.subr.mxu0 0.0
    %311 = vmatpush1.msra.mxu0 0.0
    %312 = vmatprep.subr.mxu0 0.0
    %313 = vmatpush1.msra.mxu0 0.0
    %314 = vmatprep.subr.mxu0 0.0
    %315 = vmatpush1.msra.mxu0 0.0
    %316 = vmatprep.subr.mxu0 0.0
    %317 = vmatpush1.msra.mxu0 0.0
    %318 = vmatprep.subr.mxu0 0.0
    %319 = vmatpush1.msra.mxu0 0.0
    %320 = vmatprep.subr.mxu0 0.0
    %321 = vmatpush1.msra.mxu0 0.0
    %322 = vmatprep.subr.mxu0 0.0
    %323 = vmatpush1.msra.mxu0 0.0
    %324 = vmatprep.subr.mxu0 0.0
    %325 = vmatpush1.msra.mxu0 0.0
    %326 = vmatprep.subr.mxu0 0.0
    %327 = vmatpush1.msra.mxu0 0.0
    %328 = vmatprep.subr.mxu0 0.0
    %329 = vmatpush1.msra.mxu0 0.0
    %330 = vmatprep.mubr.f32.mxu0 0.0
    %331 = vmatmul.mubr.f32.gmra.mrb[0].mxu0 %v244
    %v332 = vpop.f32.mrb[0].mxu0
    %v333 = vadd.f32 %v265, %v332
    %v334 = vpop.f32.mrb[0].mxu0
    %335 = vdwg.mxu0
    %v336 = vmax.f32 %v333, 0.0
    %vm337 = vcmask 31744
    %338 = vst.msk [vmem:[%s3] sm:$0xff] %vm337, %v336
    // Predicated region
    $region26: #{tpu_custom_call.1} parent=1 // pred_check
      _
    $region27: #{tpu_custom_call.1} parent=1 // pred_check_branch
      %340 = sbr.rel (0) target = $region29
    $region28: #{tpu_custom_call.1} parent=1 // pred_region
      _
    $region29: #{tpu_custom_call.1} parent=1 // pred_fallthru
      _
    // Predicated region
    $region30: #{tpu_custom_call.1} parent=1 // pred_check
      _
    $region31: #{tpu_custom_call.1} parent=1 // pred_check_branch
      %342 = sbr.rel (0) target = $region33
    $region32: #{tpu_custom_call.1} parent=1 // pred_region
      _
    $region33: #{tpu_custom_call.1} parent=1 // pred_fallthru
      _
    %343 = vsyncpa [#allocation3], 1
    %344 = vsyncpa [#allocation5], 1

</llo_original>
